<compile_context>
chip_gen: v7x
topology: tpu7x:2x2x1
jax: 0.10.0
libtpu: 0.0.40
codegen_flags: <defaults>
</compile_context>

<pallas_src>
import jax
import jax.numpy as jnp
from jax.experimental import pallas as pl
from jax.experimental.pallas import tpu as pltpu


# ----------------------------- helpers ---------------------------------------

def _round_up(x, m):
    return (x + m - 1) // m * m


def _pick_tile(n_pad, cap, min_tiles=1):
    """Largest 128*2^k tile <= cap that divides n_pad and leaves >= min_tiles tiles."""
    t = 128
    while (t * 2 <= cap and n_pad % (t * 2) == 0
           and n_pad // (t * 2) >= min_tiles):
        t *= 2
    return t


# ----------------------------- Pallas kernels --------------------------------

def _project_kernel(x_ref, wc_ref, h_ref):
    # h = x @ W_conv  (bf16 inputs, f32 MXU accumulate, bf16 store for stage 2)
    h = jnp.dot(x_ref[...], wc_ref[...], preferred_element_type=jnp.float32)
    h_ref[...] = h.astype(h_ref.dtype)


def _make_agg_kernel(c_out, tk, eps=1e-5):
    inv_c = 1.0 / float(c_out)

    def agg_kernel(adj_ref, h_ref, bc_ref, gamma_ref, beta_ref,
                   wl_ref, bl_ref, o_ref, acc_ref):
        k = pl.program_id(1)

        @pl.when(k == 0)
        def _():
            acc_ref[...] = jnp.zeros_like(acc_ref)

        # h is resident in VMEM at full height (constant block index);
        # slice the current reduction chunk in-kernel.
        start = pl.multiple_of(k * tk, 128)
        h_chunk = h_ref[pl.ds(start, tk), :]
        # A_hat[row_tile, k_tile] @ h[k_tile, :]   (bf16 in, f32 accumulate)
        acc_ref[...] += jnp.dot(adj_ref[...], h_chunk,
                                preferred_element_type=jnp.float32)

        @pl.when(k == pl.num_programs(1) - 1)
        def _():
            # GCNConv bias + ReLU (padded lanes are exactly zero)
            h = acc_ref[...] + bc_ref[...]
            h = jnp.maximum(h, 0.0)

            # LayerNorm over the TRUE c_out features (mask padded lanes)
            cpad = h.shape[-1]
            mask = (jax.lax.broadcasted_iota(jnp.int32, (1, cpad), 1)
                    < c_out).astype(jnp.float32)
            mean = jnp.sum(h, axis=-1, keepdims=True) * inv_c
            diff = (h - mean) * mask
            var = jnp.sum(diff * diff, axis=-1, keepdims=True) * inv_c
            hn = diff * jax.lax.rsqrt(var + eps)
            hn = hn * gamma_ref[...] + beta_ref[...]

            # Dropout: inference mode -> identity.
            # Linear: hn @ W_lin^T + b_lin  (bf16 MXU inputs, f32 accumulate)
            out = jnp.dot(hn.astype(wl_ref.dtype), wl_ref[...],
                          preferred_element_type=jnp.float32) + bl_ref[...]
            o_ref[...] = out.astype(o_ref.dtype)

    return agg_kernel


# ------------------------------ JAX glue --------------------------------------

def build_normalized_adj(edge_index, edge_weight, num_nodes):
    """Dense D^{-1/2}(A + I)D^{-1/2} matching PyG GCNConv, built at (n, n)."""
    row = edge_index[0]
    col = edge_index[1]
    if edge_weight is None:
        edge_weight = jnp.ones(row.shape[0], dtype=jnp.float32)
    loop = jnp.arange(num_nodes, dtype=row.dtype)
    row = jnp.concatenate([row, loop])
    col = jnp.concatenate([col, loop])
    ew = jnp.concatenate([edge_weight.astype(jnp.float32),
                          jnp.ones(num_nodes, dtype=jnp.float32)])
    deg = jnp.zeros(num_nodes, dtype=jnp.float32).at[col].add(ew)
    dinv = jnp.where(deg > 0, jax.lax.rsqrt(deg), 0.0)
    norm = dinv[row] * ew * dinv[col]
    # aggregation at target: out[i] = sum_j A_hat[i, j] * h[j]
    adj = jnp.zeros((num_nodes, num_nodes), dtype=jnp.float32).at[col, row].add(norm)
    return adj


def init_params(key, in_channels, out_channels):
    k1, k2, k3 = jax.random.split(key, 3)
    scale_c = (6.0 / (in_channels + out_channels)) ** 0.5
    w_conv = jax.random.uniform(k1, (in_channels, out_channels), jnp.float32,
                                -scale_c, scale_c)
    b_conv = jnp.zeros((1, out_channels), jnp.float32)
    gamma = jnp.ones((1, out_channels), jnp.float32)
    beta = jnp.zeros((1, out_channels), jnp.float32)
    bound = 1.0 / (out_channels ** 0.5)
    w_lin_t = jax.random.uniform(k2, (out_channels, out_channels), jnp.float32,
                                 -bound, bound)   # stored as W^T
    b_lin = jax.random.uniform(k3, (1, out_channels), jnp.float32, -bound, bound)
    return dict(w_conv=w_conv, b_conv=b_conv, gamma=gamma, beta=beta,
                w_lin_t=w_lin_t, b_lin=b_lin)


def gcn_block_forward(x, edge_index, edge_weight, params):
    n, c_in = x.shape
    c_out = params["w_conv"].shape[1]

    # Tight padding: N to a multiple of 128 only; tiles chosen to divide n_pad.
    c_in_p = _round_up(c_in, 128)
    c_out_p = _round_up(c_out, 128)
    n_pad = _round_up(n, 128)
    tm = _pick_tile(n_pad, 1024, min_tiles=2)   # row tile; keep >=2 tiles (megacore)
    tk = _pick_tile(n_pad, 2048, min_tiles=1)   # adjacency reduction tile

    f32, bf16 = jnp.float32, jnp.bfloat16
    xp = jnp.zeros((n_pad, c_in_p), bf16).at[:n, :c_in].set(x.astype(bf16))
    wc = jnp.zeros((c_in_p, c_out_p), bf16).at[:c_in, :c_out].set(
        params["w_conv"].astype(bf16))
    bc = jnp.zeros((1, c_out_p), f32).at[:, :c_out].set(params["b_conv"])
    gamma = jnp.zeros((1, c_out_p), f32).at[:, :c_out].set(params["gamma"])
    beta = jnp.zeros((1, c_out_p), f32).at[:, :c_out].set(params["beta"])
    wl = jnp.zeros((c_out_p, c_out_p), bf16).at[:c_out, :c_out].set(
        params["w_lin_t"].astype(bf16))
    bl = jnp.zeros((1, c_out_p), f32).at[:, :c_out].set(params["b_lin"])

    # bf16 adjacency built at (n, n), cast, then padded once (cheap glue traffic).
    adj = jnp.pad(build_normalized_adj(edge_index, edge_weight, n).astype(bf16),
                  ((0, n_pad - n), (0, n_pad - n)))

    # ---- Stage 1: h = x @ W_conv (hoisted out of the adjacency reduction) ----
    h = pl.pallas_call(
        _project_kernel,
        out_shape=jax.ShapeDtypeStruct((n_pad, c_out_p), bf16),
        grid=(n_pad // tm,),
        in_specs=[pl.BlockSpec((tm, c_in_p), lambda i: (i, 0)),
                  pl.BlockSpec((c_in_p, c_out_p), lambda i: (0, 0))],
        out_specs=pl.BlockSpec((tm, c_out_p), lambda i: (i, 0)),
        compiler_params=pltpu.CompilerParams(
            dimension_semantics=("parallel",)),
    )(xp, wc)

    # Explicit VMEM budget (resident h + double-buffered tiles + acc + weights),
    # covers v5e's 16 MiB scoped default, stays within v7x's 64 MiB physical VMEM.
    vmem_bytes = (
        2 * n_pad * c_out_p * 2        # resident h (bf16, conservatively 2 bufs)
        + 2 * tm * tk * 2              # double-buffered A_hat tiles (bf16)
        + 2 * tm * c_out_p * 4         # double-buffered output tiles (f32)
        + tm * c_out_p * 4             # f32 accumulator
        + 2 * c_out_p * c_out_p * 2    # W_lin^T (bf16)
        + 16 * c_out_p * 4             # bias / gamma / beta / b_lin vectors
    )
    vmem_limit = int(min(max(32 * 1024 * 1024, int(vmem_bytes * 1.5)),
                         64 * 1024 * 1024))

    # ---- Stage 2: out = epilogue(A_hat @ h), rows x K grid, h resident in VMEM --
    agg_kernel = _make_agg_kernel(c_out, tk)
    out_p = pl.pallas_call(
        agg_kernel,
        out_shape=jax.ShapeDtypeStruct((n_pad, c_out_p), f32),
        grid=(n_pad // tm, n_pad // tk),
        in_specs=[
            pl.BlockSpec((tm, tk), lambda i, k: (i, k)),            # A_hat tile
            pl.BlockSpec((n_pad, c_out_p), lambda i, k: (0, 0)),    # h (resident)
            pl.BlockSpec((1, c_out_p), lambda i, k: (0, 0)),        # b_conv
            pl.BlockSpec((1, c_out_p), lambda i, k: (0, 0)),        # gamma
            pl.BlockSpec((1, c_out_p), lambda i, k: (0, 0)),        # beta
            pl.BlockSpec((c_out_p, c_out_p), lambda i, k: (0, 0)),  # W_lin^T
            pl.BlockSpec((1, c_out_p), lambda i, k: (0, 0)),        # b_lin
        ],
        out_specs=pl.BlockSpec((tm, c_out_p), lambda i, k: (i, 0)),
        scratch_shapes=[pltpu.VMEM((tm, c_out_p), jnp.float32)],
        compiler_params=pltpu.CompilerParams(
            dimension_semantics=("parallel", "arbitrary"),
            vmem_limit_bytes=vmem_limit),
    )(adj, h, bc, gamma, beta, wl, bl)

    return out_p[:n, :c_out]


# ------------------------------- driver ---------------------------------------

if __name__ == "__main__":
    key = jax.random.PRNGKey(0)
    k_x, k_w, k_ew = jax.random.split(key, 3)

    N, C_IN, C_OUT = 16, 8, 32

    # node features
    x = jax.random.normal(k_x, (N, C_IN), jnp.float32)

    # a small bidirectional ring graph
    src = jnp.arange(N, dtype=jnp.int32)
    dst = (src + 1) % N
    edge_index = jnp.stack([jnp.concatenate([src, dst]),
                            jnp.concatenate([dst, src])], axis=0)  # [2, 2N]
    edge_weight = jax.random.uniform(k_ew, (edge_index.shape[1],), jnp.float32,
                                     0.5, 1.5)

    params = init_params(k_w, C_IN, C_OUT)

    fwd = jax.jit(gcn_block_forward)
    out = fwd(x, edge_index, edge_weight, params)
    jax.block_until_ready(out)

    assert out.shape == (N, C_OUT)
    assert bool(jnp.all(jnp.isfinite(out)))
    print("KERNEL_OK")
</pallas_src>

<mosaic_0001>
module attributes {stable_mosaic.version = 11 : i64} {
  func.func private @main(%arg0: i32) attributes {dimension_semantics = [#tpu.dimension_semantics<core_parallel>], iteration_bounds = array<i64: 2>, tpu.core_type = #tpu.core_type<sc_scalar_subcore>, window_params = []} {
    return
  }
}

module attributes {stable_mosaic.version = 11 : i64} {
  func.func private @main(%arg0: i32) attributes {dimension_semantics = [#tpu.dimension_semantics<core_parallel>], iteration_bounds = array<i64: 2>, tpu.core_type = #tpu.core_type<sc_scalar_subcore>, window_params = []} {
    return
  }
}

module attributes {stable_mosaic.version = 11 : i64} {
  func.func @_project_kernel(%arg0: i32, %arg1: memref<128x128xbf16, #tpu.memory_space<vmem>>, %arg2: memref<128x128xbf16, #tpu.memory_space<vmem>>, %arg3: memref<128x128xbf16, #tpu.memory_space<vmem>>) attributes {dimension_semantics = [#tpu.dimension_semantics<parallel>], iteration_bounds = array<i64: 1>, scalar_prefetch = 0 : i64, scratch_operands = 0 : i64, tpu.core_type = #tpu.core_type<tc>, window_params = [{transform_indices = @transform_0, window_bounds = array<i64: 128, 128>}, {pipeline_mode = #tpu.pipeline_mode<synchronous>, transform_indices = @transform_1, window_bounds = array<i64: 128, 128>}, {transform_indices = @transform_2, window_bounds = array<i64: 128, 128>}]} {
    %c0 = arith.constant 0 : index
    %c0_0 = arith.constant 0 : index
    %0 = vector.load %arg1[%c0, %c0_0] : memref<128x128xbf16, #tpu.memory_space<vmem>>, vector<128x128xbf16>
    %c0_1 = arith.constant 0 : index
    %c0_2 = arith.constant 0 : index
    %1 = vector.load %arg2[%c0_1, %c0_2] : memref<128x128xbf16, #tpu.memory_space<vmem>>, vector<128x128xbf16>
    %cst = arith.constant dense<0.000000e+00> : vector<128x128xf32>
    %2 = tpu.matmul %0, %1, %cst {dimension_numbers = #tpu.dot_dimension_numbers<[1], [0], [0], [1], [0, 0, 1, 1], [], []>} : vector<128x128xbf16>, vector<128x128xbf16>, vector<128x128xf32> -> vector<128x128xf32>
    %3 = arith.truncf %2 : vector<128x128xf32> to vector<128x128xbf16>
    %c0_3 = arith.constant 0 : index
    %c0_4 = arith.constant 0 : index
    %4 = vector.load %arg3[%c0_3, %c0_4] : memref<128x128xbf16, #tpu.memory_space<vmem>>, vector<128x128xbf16>
    tpu.vector_store %arg3[%c0_3, %c0_4], %3 {strides = array<i32>} : memref<128x128xbf16, #tpu.memory_space<vmem>>, vector<128x128xbf16>,
    return
  }
  func.func @transform_0(%arg0: i32) -> (i32, i32) {
    %c0_i32 = arith.constant 0 : i32
    %c0_i32_0 = arith.constant 0 : i32
    return %arg0, %c0_i32 : i32, i32
  }
  func.func @transform_1(%arg0: i32) -> (i32, i32) {
    %c0_i32 = arith.constant 0 : i32
    %c0_i32_0 = arith.constant 0 : i32
    %c0_i32_1 = arith.constant 0 : i32
    return %c0_i32, %c0_i32_0 : i32, i32
  }
  func.func @transform_2(%arg0: i32) -> (i32, i32) {
    %c0_i32 = arith.constant 0 : i32
    %c0_i32_0 = arith.constant 0 : i32
    return %arg0, %c0_i32 : i32, i32
  }
}

module attributes {stable_mosaic.version = 11 : i64} {
  func.func @agg_kernel(%arg0: i32, %arg1: i32, %arg2: memref<128x128xbf16, #tpu.memory_space<vmem>>, %arg3: memref<128x128xbf16, #tpu.memory_space<vmem>>, %arg4: memref<1x128xf32, #tpu.memory_space<vmem>>, %arg5: memref<1x128xf32, #tpu.memory_space<vmem>>, %arg6: memref<1x128xf32, #tpu.memory_space<vmem>>, %arg7: memref<128x128xbf16, #tpu.memory_space<vmem>>, %arg8: memref<1x128xf32, #tpu.memory_space<vmem>>, %arg9: memref<128x128xf32, #tpu.memory_space<vmem>>, %arg10: memref<128x128xf32, #tpu.memory_space<vmem>>) attributes {dimension_semantics = [#tpu.dimension_semantics<parallel>, #tpu.dimension_semantics<arbitrary>], iteration_bounds = array<i64: 1, 1>, scalar_prefetch = 0 : i64, scratch_operands = 1 : i64, tpu.core_type = #tpu.core_type<tc>, window_params = [{transform_indices = @transform_0, window_bounds = array<i64: 128, 128>}, {pipeline_mode = #tpu.pipeline_mode<synchronous>, transform_indices = @transform_1, window_bounds = array<i64: 128, 128>}, {pipeline_mode = #tpu.pipeline_mode<synchronous>, transform_indices = @transform_2, window_bounds = array<i64: 1, 128>}, {pipeline_mode = #tpu.pipeline_mode<synchronous>, transform_indices = @transform_3, window_bounds = array<i64: 1, 128>}, {pipeline_mode = #tpu.pipeline_mode<synchronous>, transform_indices = @transform_4, window_bounds = array<i64: 1, 128>}, {pipeline_mode = #tpu.pipeline_mode<synchronous>, transform_indices = @transform_5, window_bounds = array<i64: 128, 128>}, {pipeline_mode = #tpu.pipeline_mode<synchronous>, transform_indices = @transform_6, window_bounds = array<i64: 1, 128>}, {transform_indices = @transform_7, window_bounds = array<i64: 128, 128>}]} {
    %c0_i32 = arith.constant 0 : i32
    %0 = arith.cmpi eq, %arg1, %c0_i32 : i32
    %1 = arith.extui %0 : i1 to i32
    %c0_i32_0 = arith.constant 0 : i32
    %2 = arith.cmpi ne, %1, %c0_i32_0 : i32
    scf.if %2 {
      %cst_9 = arith.constant 0.000000e+00 : f32
      %15 = vector.broadcast %cst_9 : f32 to vector<128x128xf32>
      %c0_10 = arith.constant 0 : index
      %c0_11 = arith.constant 0 : index
      %16 = vector.load %arg10[%c0_10, %c0_11] : memref<128x128xf32, #tpu.memory_space<vmem>>, vector<128x128xf32>
      tpu.vector_store %arg10[%c0_10, %c0_11], %15 {strides = array<i32>} : memref<128x128xf32, #tpu.memory_space<vmem>>, vector<128x128xf32>,
    } else {
    }
    %c128_i32 = arith.constant 128 : i32
    %3 = arith.muli %arg1, %c128_i32 : i32
    %4 = tpu.assume_multiple %3, 128 : i32
    %5 = arith.index_cast %4 : i32 to index
    %c0 = arith.constant 0 : index
    %6 = vector.load %arg3[%5, %c0] : memref<128x128xbf16, #tpu.memory_space<vmem>>, vector<128x128xbf16>
    %c0_1 = arith.constant 0 : index
    %c0_2 = arith.constant 0 : index
    %7 = vector.load %arg10[%c0_1, %c0_2] : memref<128x128xf32, #tpu.memory_space<vmem>>, vector<128x128xf32>
    %c0_3 = arith.constant 0 : index
    %c0_4 = arith.constant 0 : index
    %8 = vector.load %arg2[%c0_3, %c0_4] : memref<128x128xbf16, #tpu.memory_space<vmem>>, vector<128x128xbf16>
    %cst = arith.constant dense<0.000000e+00> : vector<128x128xf32>
    %9 = tpu.matmul %8, %6, %cst {dimension_numbers = #tpu.dot_dimension_numbers<[1], [0], [0], [1], [0, 0, 1, 1], [], []>} : vector<128x128xbf16>, vector<128x128xbf16>, vector<128x128xf32> -> vector<128x128xf32>
    %10 = arith.addf %7, %9 : vector<128x128xf32>
    %c0_5 = arith.constant 0 : index
    %c0_6 = arith.constant 0 : index
    %11 = vector.load %arg10[%c0_5, %c0_6] : memref<128x128xf32, #tpu.memory_space<vmem>>, vector<128x128xf32>
    tpu.vector_store %arg10[%c0_5, %c0_6], %10 {strides = array<i32>} : memref<128x128xf32, #tpu.memory_space<vmem>>, vector<128x128xf32>,
    %c0_i32_7 = arith.constant 0 : i32
    %12 = arith.cmpi eq, %arg1, %c0_i32_7 : i32
    %13 = arith.extui %12 : i1 to i32
    %c0_i32_8 = arith.constant 0 : i32
    %14 = arith.cmpi ne, %13, %c0_i32_8 : i32
    scf.if %14 {
      %c0_9 = arith.constant 0 : index
      %c0_10 = arith.constant 0 : index
      %15 = vector.load %arg10[%c0_9, %c0_10] : memref<128x128xf32, #tpu.memory_space<vmem>>, vector<128x128xf32>
      %c0_11 = arith.constant 0 : index
      %c0_12 = arith.constant 0 : index
      %16 = vector.load %arg4[%c0_11, %c0_12] : memref<1x128xf32, #tpu.memory_space<vmem>>, vector<1x128xf32>
      %17 = vector.broadcast %16 : vector<1x128xf32> to vector<128x128xf32>
      %18 = arith.addf %15, %17 : vector<128x128xf32>
      %cst_13 = arith.constant 0.000000e+00 : f32
      %19 = vector.broadcast %cst_13 : f32 to vector<128x128xf32>
      %20 = arith.maximumf %18, %19 : vector<128x128xf32>
      %21 = tpu.iota {dimensions = array<i32: 1>} : vector<1x128xi32>
      %c32_i32 = arith.constant 32 : i32
      %22 = vector.broadcast %c32_i32 : i32 to vector<1x128xi32>
      %23 = arith.cmpi slt, %21, %22 : vector<1x128xi32>
      %24 = arith.extui %23 : vector<1x128xi1> to vector<1x128xi32>
      %25 = arith.sitofp %24 : vector<1x128xi32> to vector<1x128xf32>
      %cst_14 = arith.constant dense<0.000000e+00> : vector<128xf32>
      %26 = vector.multi_reduction <add>, %20, %cst_14 [1] : vector<128x128xf32> to vector<128xf32>
      %27 = vector.shape_cast %26 : vector<128xf32> to vector<128x1xf32>
      %cst_15 = arith.constant 3.125000e-02 : f32
      %28 = vector.broadcast %cst_15 : f32 to vector<128x1xf32>
      %29 = arith.mulf %27, %28 : vector<128x1xf32>
      %30 = vector.broadcast %29 : vector<128x1xf32> to vector<128x128xf32>
      %31 = arith.subf %20, %30 : vector<128x128xf32>
      %32 = vector.broadcast %25 : vector<1x128xf32> to vector<128x128xf32>
      %33 = arith.mulf %31, %32 : vector<128x128xf32>
      %34 = arith.mulf %33, %33 : vector<128x128xf32>
      %cst_16 = arith.constant dense<0.000000e+00> : vector<128xf32>
      %35 = vector.multi_reduction <add>, %34, %cst_16 [1] : vector<128x128xf32> to vector<128xf32>
      %36 = vector.shape_cast %35 : vector<128xf32> to vector<128x1xf32>
      %cst_17 = arith.constant 3.125000e-02 : f32
      %37 = vector.broadcast %cst_17 : f32 to vector<128x1xf32>
      %38 = arith.mulf %36, %37 : vector<128x1xf32>
      %cst_18 = arith.constant 9.99999974E-6 : f32
      %39 = vector.broadcast %cst_18 : f32 to vector<128x1xf32>
      %40 = arith.addf %38, %39 : vector<128x1xf32>
      %41 = math.rsqrt %40 : vector<128x1xf32>
      %42 = vector.broadcast %41 : vector<128x1xf32> to vector<128x128xf32>
      %43 = arith.mulf %33, %42 : vector<128x128xf32>
      %c0_19 = arith.constant 0 : index
      %c0_20 = arith.constant 0 : index
      %44 = vector.load %arg5[%c0_19, %c0_20] : memref<1x128xf32, #tpu.memory_space<vmem>>, vector<1x128xf32>
      %45 = vector.broadcast %44 : vector<1x128xf32> to vector<128x128xf32>
      %46 = arith.mulf %43, %45 : vector<128x128xf32>
      %c0_21 = arith.constant 0 : index
      %c0_22 = arith.constant 0 : index
      %47 = vector.load %arg6[%c0_21, %c0_22] : memref<1x128xf32, #tpu.memory_space<vmem>>, vector<1x128xf32>
      %48 = vector.broadcast %47 : vector<1x128xf32> to vector<128x128xf32>
      %49 = arith.addf %46, %48 : vector<128x128xf32>
      %50 = arith.truncf %49 : vector<128x128xf32> to vector<128x128xbf16>
      %c0_23 = arith.constant 0 : index
      %c0_24 = arith.constant 0 : index
      %51 = vector.load %arg7[%c0_23, %c0_24] : memref<128x128xbf16, #tpu.memory_space<vmem>>, vector<128x128xbf16>
      %cst_25 = arith.constant dense<0.000000e+00> : vector<128x128xf32>
      %52 = tpu.matmul %50, %51, %cst_25 {dimension_numbers = #tpu.dot_dimension_numbers<[1], [0], [0], [1], [0, 0, 1, 1], [], []>} : vector<128x128xbf16>, vector<128x128xbf16>, vector<128x128xf32> -> vector<128x128xf32>
      %c0_26 = arith.constant 0 : index
      %c0_27 = arith.constant 0 : index
      %53 = vector.load %arg8[%c0_26, %c0_27] : memref<1x128xf32, #tpu.memory_space<vmem>>, vector<1x128xf32>
      %54 = vector.broadcast %53 : vector<1x128xf32> to vector<128x128xf32>
      %55 = arith.addf %52, %54 : vector<128x128xf32>
      %c0_28 = arith.constant 0 : index
      %c0_29 = arith.constant 0 : index
      %56 = vector.load %arg9[%c0_28, %c0_29] : memref<128x128xf32, #tpu.memory_space<vmem>>, vector<128x128xf32>
      tpu.vector_store %arg9[%c0_28, %c0_29], %55 {strides = array<i32>} : memref<128x128xf32, #tpu.memory_space<vmem>>, vector<128x128xf32>,
    } else {
    }
    return
  }
  func.func @transform_0(%arg0: i32, %arg1: i32) -> (i32, i32) {
    %c0_i32 = arith.constant 0 : i32
    return %arg0, %arg1 : i32, i32
  }
  func.func @transform_1(%arg0: i32, %arg1: i32) -> (i32, i32) {
    %c0_i32 = arith.constant 0 : i32
    %c0_i32_0 = arith.constant 0 : i32
    %c0_i32_1 = arith.constant 0 : i32
    return %c0_i32, %c0_i32_0 : i32, i32
  }
  func.func @transform_2(%arg0: i32, %arg1: i32) -> (i32, i32) {
    %c0_i32 = arith.constant 0 : i32
    %c0_i32_0 = arith.constant 0 : i32
    %c0_i32_1 = arith.constant 0 : i32
    return %c0_i32, %c0_i32_0 : i32, i32
  }
  func.func @transform_3(%arg0: i32, %arg1: i32) -> (i32, i32) {
    %c0_i32 = arith.constant 0 : i32
    %c0_i32_0 = arith.constant 0 : i32
    %c0_i32_1 = arith.constant 0 : i32
    return %c0_i32, %c0_i32_0 : i32, i32
  }
  func.func @transform_4(%arg0: i32, %arg1: i32) -> (i32, i32) {
    %c0_i32 = arith.constant 0 : i32
    %c0_i32_0 = arith.constant 0 : i32
    %c0_i32_1 = arith.constant 0 : i32
    return %c0_i32, %c0_i32_0 : i32, i32
  }
  func.func @transform_5(%arg0: i32, %arg1: i32) -> (i32, i32) {
    %c0_i32 = arith.constant 0 : i32
    %c0_i32_0 = arith.constant 0 : i32
    %c0_i32_1 = arith.constant 0 : i32
    return %c0_i32, %c0_i32_0 : i32, i32
  }
  func.func @transform_6(%arg0: i32, %arg1: i32) -> (i32, i32) {
    %c0_i32 = arith.constant 0 : i32
    %c0_i32_0 = arith.constant 0 : i32
    %c0_i32_1 = arith.constant 0 : i32
    return %c0_i32, %c0_i32_0 : i32, i32
  }
  func.func @transform_7(%arg0: i32, %arg1: i32) -> (i32, i32) {
    %c0_i32 = arith.constant 0 : i32
    %c0_i32_0 = arith.constant 0 : i32
    return %arg0, %c0_i32 : i32, i32
  }
}

</mosaic_0001>

<llo_original>
// kernel: gcn_block_forward.2
$region0: #{gcn_block_forward.2}
  #allocation0 [shape = 'u32[]', space=smem, size = 0x4, offset = 0x4, fixed_abs, tag = 'smem constant byte address 0x4 - core index']
  #allocation1 [shape = 'u32[144,128]{1,0:T(1,128)}', space=vmem, size = 0x12000, scoped, tag = 'internal scratch']
  %s0 = inlined_call_operand.vmem [shape: bf16[128,128], index: 0, kind: input, shape index: {}]
  %s1 = inlined_call_operand.vmem [shape: bf16[128,128], index: 1, kind: input, shape index: {}]
  %s2 = inlined_call_operand.vmem [shape: bf16[128,128], index: 2, kind: output, shape index: {}]
  %s3 = sld [smem:[#allocation0]]
  $region18: #{gcn_block_forward.2} parent=0
    _
  %s5 = ssub.s32 1, %s3
  %s6 = scalar_select 0, %s5, %s3
  // Predicated region
  $region2: #{gcn_block_forward.2} parent=0 // pred_check
    _
  $region3: #{gcn_block_forward.2} parent=0 // pred_check_branch
    %8 = sbr.rel (0) target = $region5
  $region4: #{gcn_block_forward.2} parent=0 // pred_region
    _
  $region5: #{gcn_block_forward.2} parent=0 // pred_fallthru
    _
  // Predicated region
  $region6: #{gcn_block_forward.2} parent=0 // pred_check
    _
  $region7: #{gcn_block_forward.2} parent=0 // pred_check_branch
    %10 = sbr.rel (0) target = $region9
  $region8: #{gcn_block_forward.2} parent=0 // pred_region
    _
  $region9: #{gcn_block_forward.2} parent=0 // pred_fallthru
    _
  %v12 = vld [vmem:[%s0] sm:$0xf]
  %v13 = vld [vmem:[%s0 + $0x4] sm:$0xf]
  %v14 = vld [vmem:[%s0 + $0x8] sm:$0xf]
  %v15 = vld [vmem:[%s0 + $0xc] sm:$0xf]
  %v16 = vld [vmem:[%s0 + $0x10] sm:$0xf]
  %v17 = vld [vmem:[%s0 + $0x14] sm:$0xf]
  %v18 = vld [vmem:[%s0 + $0x18] sm:$0xf]
  %v19 = vld [vmem:[%s0 + $0x1c] sm:$0xf]
  %v20 = vld [vmem:[%s0 + $0x20] sm:$0xf]
  %v21 = vld [vmem:[%s0 + $0x24] sm:$0xf]
  %v22 = vld [vmem:[%s0 + $0x28] sm:$0xf]
  %v23 = vld [vmem:[%s0 + $0x2c] sm:$0xf]
  %v24 = vld [vmem:[%s0 + $0x30] sm:$0xf]
  %v25 = vld [vmem:[%s0 + $0x34] sm:$0xf]
  %v26 = vld [vmem:[%s0 + $0x38] sm:$0xf]
  %v27 = vld [vmem:[%s0 + $0x3c] sm:$0xf]
  %v28 = vld [vmem:[%s1] sm:$0xf]
  %v29 = vld [vmem:[%s1 + $0x4] sm:$0xf]
  %v30 = vld [vmem:[%s1 + $0x8] sm:$0xf]
  %v31 = vld [vmem:[%s1 + $0xc] sm:$0xf]
  %v32 = vld [vmem:[%s1 + $0x10] sm:$0xf]
  %v33 = vld [vmem:[%s1 + $0x14] sm:$0xf]
  %v34 = vld [vmem:[%s1 + $0x18] sm:$0xf]
  %v35 = vld [vmem:[%s1 + $0x1c] sm:$0xf]
  %v36 = vld [vmem:[%s1 + $0x20] sm:$0xf]
  %v37 = vld [vmem:[%s1 + $0x24] sm:$0xf]
  %v38 = vld [vmem:[%s1 + $0x28] sm:$0xf]
  %v39 = vld [vmem:[%s1 + $0x2c] sm:$0xf]
  %v40 = vld [vmem:[%s1 + $0x30] sm:$0xf]
  %v41 = vld [vmem:[%s1 + $0x34] sm:$0xf]
  %v42 = vld [vmem:[%s1 + $0x38] sm:$0xf]
  %v43 = vld [vmem:[%s1 + $0x3c] sm:$0xf]
  %v60 = vunpack.c.l.b16 %v12
  %v61 = vunpack.c.l.b16 %v13
  %v62 = vunpack.c.l.b16 %v14
  %v63 = vunpack.c.l.b16 %v15
  %v64 = vunpack.c.l.b16 %v16
  %v65 = vunpack.c.l.b16 %v17
  %v66 = vunpack.c.l.b16 %v18
  %v67 = vunpack.c.l.b16 %v19
  %v68 = vunpack.c.l.b16 %v20
  %v69 = vunpack.c.l.b16 %v21
  %v70 = vunpack.c.l.b16 %v22
  %v71 = vunpack.c.l.b16 %v23
  %v72 = vunpack.c.l.b16 %v24
  %v73 = vunpack.c.l.b16 %v25
  %v74 = vunpack.c.l.b16 %v26
  %v75 = vunpack.c.l.b16 %v27
  %v76 = vpack.c.b16 %v61, %v60
  %v77 = vpack.c.b16 %v63, %v62
  %v78 = vpack.c.b16 %v65, %v64
  %v79 = vpack.c.b16 %v67, %v66
  %v80 = vpack.c.b16 %v69, %v68
  %v81 = vpack.c.b16 %v71, %v70
  %v82 = vpack.c.b16 %v73, %v72
  %v83 = vpack.c.b16 %v75, %v74
  %v108 = vunpack.c.l.b16 %v28
  %v109 = vunpack.c.l.b16 %v29
  %v110 = vunpack.c.l.b16 %v30
  %v111 = vunpack.c.l.b16 %v31
  %v112 = vunpack.c.l.b16 %v32
  %v113 = vunpack.c.l.b16 %v33
  %v114 = vunpack.c.l.b16 %v34
  %v115 = vunpack.c.l.b16 %v35
  %v116 = vunpack.c.l.b16 %v36
  %v117 = vunpack.c.l.b16 %v37
  %v118 = vunpack.c.l.b16 %v38
  %v119 = vunpack.c.l.b16 %v39
  %v120 = vunpack.c.l.b16 %v40
  %v121 = vunpack.c.l.b16 %v41
  %v122 = vunpack.c.l.b16 %v42
  %v123 = vunpack.c.l.b16 %v43
  %v124 = vpack.c.b16 %v109, %v108
  %v125 = vpack.c.b16 %v111, %v110
  %v126 = vpack.c.b16 %v113, %v112
  %v127 = vpack.c.b16 %v115, %v114
  %v128 = vpack.c.b16 %v117, %v116
  %v129 = vpack.c.b16 %v119, %v118
  %v130 = vpack.c.b16 %v121, %v120
  %v131 = vpack.c.b16 %v123, %v122
  %140 = vmatprep.subr.bf16.mxu0 0
  %141 = vmatpush1.bf16.msra.mxu0 %v124
  %142 = vmatprep.subr.bf16.mxu0 0
  %143 = vmatpush1.bf16.msra.mxu0 %v125
  %144 = vmatprep.subr.bf16.mxu0 0
  %145 = vmatpush1.bf16.msra.mxu0 %v126
  %146 = vmatprep.subr.bf16.mxu0 0
  %147 = vmatpush1.bf16.msra.mxu0 %v127
  %148 = vmatprep.subr.bf16.mxu0 0
  %149 = vmatpush1.bf16.msra.mxu0 %v128
  %150 = vmatprep.subr.bf16.mxu0 0
  %151 = vmatpush1.bf16.msra.mxu0 %v129
  %152 = vmatprep.subr.bf16.mxu0 0
  %153 = vmatpush1.bf16.msra.mxu0 %v130
  %154 = vmatprep.subr.bf16.mxu0 0
  %155 = vmatpush1.bf16.msra.mxu0 %v131
  %156 = vmatprep.subr.bf16.mxu0 0
  %157 = vmatpush1.bf16.msra.mxu0 0
  %158 = vmatprep.subr.bf16.mxu0 0
  %159 = vmatpush1.bf16.msra.mxu0 0
  %160 = vmatprep.subr.bf16.mxu0 0
  %161 = vmatpush1.bf16.msra.mxu0 0
  %162 = vmatprep.subr.bf16.mxu0 0
  %163 = vmatpush1.bf16.msra.mxu0 0
  %164 = vmatprep.subr.bf16.mxu0 0
  %165 = vmatpush1.bf16.msra.mxu0 0
  %166 = vmatprep.subr.bf16.mxu0 0
  %167 = vmatpush1.bf16.msra.mxu0 0
  %168 = vmatprep.subr.bf16.mxu0 0
  %169 = vmatpush1.bf16.msra.mxu0 0
  %170 = vmatprep.subr.bf16.mxu0 0
  %171 = vmatpush1.bf16.msra.mxu0 0
  %172 = vmatprep.mubr.bf16.mxu0 0
  %173 = vmatmul.mubr.bf16.gmra.mrb[0].mxu0 %v76
  %v174 = vpop.f32.mrb[0].mxu0
  %v175 = vadd.f32 0.0, %v174
  %v176 = vpop.f32.mrb[0].mxu0
  %v177 = vpop.f32.mrb[0].mxu0
  %v178 = vadd.f32 0.0, %v177
  %v179 = vpop.f32.mrb[0].mxu0
  %180 = vmatprep.mubr.bf16.mxu0 0
  %181 = vmatmul.mubr.bf16.gmra.mrb[0].mxu0 %v77
  %v182 = vpop.f32.mrb[0].mxu0
  %v183 = vadd.f32 0.0, %v182
  %v184 = vpop.f32.mrb[0].mxu0
  %v185 = vpop.f32.mrb[0].mxu0
  %v186 = vadd.f32 0.0, %v185
  %v187 = vpop.f32.mrb[0].mxu0
  %188 = vmatprep.mubr.bf16.mxu0 0
  %189 = vmatmul.mubr.bf16.gmra.mrb[0].mxu0 %v78
  %v190 = vpop.f32.mrb[0].mxu0
  %v191 = vadd.f32 0.0, %v190
  %v192 = vpop.f32.mrb[0].mxu0
  %v193 = vpop.f32.mrb[0].mxu0
  %v194 = vadd.f32 0.0, %v193
  %v195 = vpop.f32.mrb[0].mxu0
  %196 = vmatprep.mubr.bf16.mxu0 0
  %197 = vmatmul.mubr.bf16.gmra.mrb[0].mxu0 %v79
  %v198 = vpop.f32.mrb[0].mxu0
  %v199 = vadd.f32 0.0, %v198
  %v200 = vpop.f32.mrb[0].mxu0
  %v201 = vpop.f32.mrb[0].mxu0
  %v202 = vadd.f32 0.0, %v201
  %v203 = vpop.f32.mrb[0].mxu0
  %204 = vmatprep.mubr.bf16.mxu0 0
  %205 = vmatmul.mubr.bf16.gmra.mrb[0].mxu0 %v80
  %v206 = vpop.f32.mrb[0].mxu0
  %v207 = vadd.f32 0.0, %v206
  %v208 = vpop.f32.mrb[0].mxu0
  %v209 = vpop.f32.mrb[0].mxu0
  %v210 = vadd.f32 0.0, %v209
  %v211 = vpop.f32.mrb[0].mxu0
  %212 = vmatprep.mubr.bf16.mxu0 0
  %213 = vmatmul.mubr.bf16.gmra.mrb[0].mxu0 %v81
  %v214 = vpop.f32.mrb[0].mxu0
  %v215 = vadd.f32 0.0, %v214
  %v216 = vpop.f32.mrb[0].mxu0
  %v217 = vpop.f32.mrb[0].mxu0
  %v218 = vadd.f32 0.0, %v217
  %v219 = vpop.f32.mrb[0].mxu0
  %220 = vmatprep.mubr.bf16.mxu0 0
  %221 = vmatmul.mubr.bf16.gmra.mrb[0].mxu0 %v82
  %v222 = vpop.f32.mrb[0].mxu0
  %v223 = vadd.f32 0.0, %v222
  %v224 = vpop.f32.mrb[0].mxu0
  %v225 = vpop.f32.mrb[0].mxu0
  %v226 = vadd.f32 0.0, %v225
  %v227 = vpop.f32.mrb[0].mxu0
  %228 = vmatprep.mubr.bf16.mxu0 0
  %229 = vmatmul.mubr.bf16.gmra.mrb[0].mxu0 %v83
  %v230 = vpop.f32.mrb[0].mxu0
  %v231 = vadd.f32 0.0, %v230
  %v232 = vpop.f32.mrb[0].mxu0
  %v233 = vpop.f32.mrb[0].mxu0
  %v234 = vadd.f32 0.0, %v233
  %v235 = vpop.f32.mrb[0].mxu0
  %236 = vdwg.mxu0
  %v237 = vpack.c.bf16 %v178, %v175
  %v238 = vpack.c.bf16 %v186, %v183
  %v239 = vpack.c.bf16 %v194, %v191
  %v240 = vpack.c.bf16 %v202, %v199
  %v241 = vpack.c.bf16 %v210, %v207
  %v242 = vpack.c.bf16 %v218, %v215
  %v243 = vpack.c.bf16 %v226, %v223
  %v244 = vpack.c.bf16 %v234, %v231
  %v253 = vunpack.c.l.b16 %v237
  %v254 = vunpack.c.h.b16 %v237
  %v255 = vunpack.c.l.b16 %v238
  %v256 = vunpack.c.h.b16 %v238
  %v257 = vunpack.c.l.b16 %v239
  %v258 = vunpack.c.h.b16 %v239
  %v259 = vunpack.c.l.b16 %v240
  %v260 = vunpack.c.h.b16 %v240
  %v261 = vunpack.c.l.b16 %v241
  %v262 = vunpack.c.h.b16 %v241
  %v263 = vunpack.c.l.b16 %v242
  %v264 = vunpack.c.h.b16 %v242
  %v265 = vunpack.c.l.b16 %v243
  %v266 = vunpack.c.h.b16 %v243
  %v267 = vunpack.c.l.b16 %v244
  %v268 = vunpack.c.h.b16 %v244
  %v269 = vpack.c.b16 %v253, %v253
  %v270 = vpack.c.b16 %v254, %v254
  %v271 = vpack.c.b16 %v255, %v255
  %v272 = vpack.c.b16 %v256, %v256
  %v273 = vpack.c.b16 %v257, %v257
  %v274 = vpack.c.b16 %v258, %v258
  %v275 = vpack.c.b16 %v259, %v259
  %v276 = vpack.c.b16 %v260, %v260
  %v277 = vpack.c.b16 %v261, %v261
  %v278 = vpack.c.b16 %v262, %v262
  %v279 = vpack.c.b16 %v263, %v263
  %v280 = vpack.c.b16 %v264, %v264
  %v281 = vpack.c.b16 %v265, %v265
  %v282 = vpack.c.b16 %v266, %v266
  %v283 = vpack.c.b16 %v267, %v267
  %v284 = vpack.c.b16 %v268, %v268
  %301 = vst [vmem:[%s2] sm:$0xf] %v269
  %302 = vst [vmem:[%s2 + $0x4] sm:$0xf] %v270
  %303 = vst [vmem:[%s2 + $0x8] sm:$0xf] %v271
  %304 = vst [vmem:[%s2 + $0xc] sm:$0xf] %v272
  %305 = vst [vmem:[%s2 + $0x10] sm:$0xf] %v273
  %306 = vst [vmem:[%s2 + $0x14] sm:$0xf] %v274
  %307 = vst [vmem:[%s2 + $0x18] sm:$0xf] %v275
  %308 = vst [vmem:[%s2 + $0x1c] sm:$0xf] %v276
  %309 = vst [vmem:[%s2 + $0x20] sm:$0xf] %v277
  %310 = vst [vmem:[%s2 + $0x24] sm:$0xf] %v278
  %311 = vst [vmem:[%s2 + $0x28] sm:$0xf] %v279
  %312 = vst [vmem:[%s2 + $0x2c] sm:$0xf] %v280
  %313 = vst [vmem:[%s2 + $0x30] sm:$0xf] %v281
  %314 = vst [vmem:[%s2 + $0x34] sm:$0xf] %v282
  %315 = vst [vmem:[%s2 + $0x38] sm:$0xf] %v283
  %316 = vst [vmem:[%s2 + $0x3c] sm:$0xf] %v284
  // Predicated region
  $region10: #{gcn_block_forward.2} parent=0 // pred_check
    _
  $region11: #{gcn_block_forward.2} parent=0 // pred_check_branch
    %318 = sbr.rel (0) target = $region13
  $region12: #{gcn_block_forward.2} parent=0 // pred_region
    _
  $region13: #{gcn_block_forward.2} parent=0 // pred_fallthru
    _
  // Predicated region
  $region14: #{gcn_block_forward.2} parent=0 // pred_check
    _
  $region15: #{gcn_block_forward.2} parent=0 // pred_check_branch
    %320 = sbr.rel (0) target = $region17
  $region16: #{gcn_block_forward.2} parent=0 // pred_region
    _
  $region17: #{gcn_block_forward.2} parent=0 // pred_fallthru
    _

// kernel: gcn_block_forward.3
$region0: #{gcn_block_forward.3}
  #allocation0 [shape = 'u32[]', space=smem, size = 0x4, offset = 0x4, fixed_abs, tag = 'smem constant byte address 0x4 - core index']
  #allocation1 [shape = 'u32[144,128]{1,0:T(1,128)}', space=vmem, size = 0x12000, scoped, tag = 'internal scratch']
  #allocation2 [shape = 'f32[128,128]{1,0:T(8,128)}', space=vmem, size = 0x10000, scoped, tag = 'scratch operand']
  %s0 = inlined_call_operand.vmem [shape: bf16[128,128], index: 0, kind: input, shape index: {}]
  %s1 = inlined_call_operand.vmem [shape: bf16[128,128], index: 1, kind: input, shape index: {}]
  %s2 = inlined_call_operand.vmem [shape: f32[1,128], index: 2, kind: input, shape index: {}]
  %s3 = inlined_call_operand.vmem [shape: f32[1,128], index: 3, kind: input, shape index: {}]
  %s4 = inlined_call_operand.vmem [shape: f32[1,128], index: 4, kind: input, shape index: {}]
  %s5 = inlined_call_operand.vmem [shape: bf16[128,128], index: 5, kind: input, shape index: {}]
  %s6 = inlined_call_operand.vmem [shape: f32[1,128], index: 6, kind: input, shape index: {}]
  %s7 = inlined_call_operand.vmem [shape: f32[128,128], index: 7, kind: output, shape index: {}]
  %s8 = sld [smem:[#allocation0]]
  $region46: #{gcn_block_forward.3} parent=0
    _
  %s10 = ssub.s32 1, %s8
  %s11 = scalar_select 0, %s10, %s8
  // Predicated region
  $region2: #{gcn_block_forward.3} parent=0 // pred_check
    _
  $region3: #{gcn_block_forward.3} parent=0 // pred_check_branch
    %13 = sbr.rel (0) target = $region5
  $region4: #{gcn_block_forward.3} parent=0 // pred_region
    _
  $region5: #{gcn_block_forward.3} parent=0 // pred_fallthru
    _
  // Predicated region
  $region6: #{gcn_block_forward.3} parent=0 // pred_check
    _
  $region7: #{gcn_block_forward.3} parent=0 // pred_check_branch
    %15 = sbr.rel (0) target = $region9
  $region8: #{gcn_block_forward.3} parent=0 // pred_region
    _
  $region9: #{gcn_block_forward.3} parent=0 // pred_fallthru
    _
  // Predicated region
  $region10: #{gcn_block_forward.3} parent=0 // pred_check
    _
  $region11: #{gcn_block_forward.3} parent=0 // pred_check_branch
    %17 = sbr.rel (0) target = $region13
  $region12: #{gcn_block_forward.3} parent=0 // pred_region
    _
  $region13: #{gcn_block_forward.3} parent=0 // pred_fallthru
    _
  // Predicated region
  $region14: #{gcn_block_forward.3} parent=0 // pred_check
    _
  $region15: #{gcn_block_forward.3} parent=0 // pred_check_branch
    %19 = sbr.rel (0) target = $region17
  $region16: #{gcn_block_forward.3} parent=0 // pred_region
    _
  $region17: #{gcn_block_forward.3} parent=0 // pred_fallthru
    _
  // Predicated region
  $region18: #{gcn_block_forward.3} parent=0 // pred_check
    _
  $region19: #{gcn_block_forward.3} parent=0 // pred_check_branch
    %21 = sbr.rel (0) target = $region21
  $region20: #{gcn_block_forward.3} parent=0 // pred_region
    _
  $region21: #{gcn_block_forward.3} parent=0 // pred_fallthru
    _
  // Predicated region
  $region22: #{gcn_block_forward.3} parent=0 // pred_check
    _
  $region23: #{gcn_block_forward.3} parent=0 // pred_check_branch
    %23 = sbr.rel (0) target = $region25
  $region24: #{gcn_block_forward.3} parent=0 // pred_region
    _
  $region25: #{gcn_block_forward.3} parent=0 // pred_fallthru
    _
  // Predicated region
  $region26: #{gcn_block_forward.3} parent=0 // pred_check
    _
  $region27: #{gcn_block_forward.3} parent=0 // pred_check_branch
    %25 = sbr.rel (0) target = $region29
  $region28: #{gcn_block_forward.3} parent=0 // pred_region
    _
  $region29: #{gcn_block_forward.3} parent=0 // pred_fallthru
    _
  %p27 = scmp.eq.s32.totalorder 0, 0
  // Predicated region
  $region30: #{gcn_block_forward.3} parent=0 // pred_check
    %p28 = pneg %p27
  $region31: #{gcn_block_forward.3} parent=0 // pred_check_branch
    %30 = sbr.rel (%p28) target = $region33
  $region32: #{gcn_block_forward.3} parent=0 // pred_region
    %31 = vst [vmem:[#allocation2] sm:$0xff] 0.0
    %32 = vst [vmem:[#allocation2 + $0x8] sm:$0xff] 0.0
    %33 = vst [vmem:[#allocation2 + $0x10] sm:$0xff] 0.0
    %34 = vst [vmem:[#allocation2 + $0x18] sm:$0xff] 0.0
    %35 = vst [vmem:[#allocation2 + $0x20] sm:$0xff] 0.0
    %36 = vst [vmem:[#allocation2 + $0x28] sm:$0xff] 0.0
    %37 = vst [vmem:[#allocation2 + $0x30] sm:$0xff] 0.0
    %38 = vst [vmem:[#allocation2 + $0x38] sm:$0xff] 0.0
    %39 = vst [vmem:[#allocation2 + $0x40] sm:$0xff] 0.0
    %40 = vst [vmem:[#allocation2 + $0x48] sm:$0xff] 0.0
    %41 = vst [vmem:[#allocation2 + $0x50] sm:$0xff] 0.0
    %42 = vst [vmem:[#allocation2 + $0x58] sm:$0xff] 0.0
    %43 = vst [vmem:[#allocation2 + $0x60] sm:$0xff] 0.0
    %44 = vst [vmem:[#allocation2 + $0x68] sm:$0xff] 0.0
    %45 = vst [vmem:[#allocation2 + $0x70] sm:$0xff] 0.0
    %46 = vst [vmem:[#allocation2 + $0x78] sm:$0xff] 0.0
  $region33: #{gcn_block_forward.3} parent=0 // pred_fallthru
    _
  %s47 = smul.u32 0, 128
  %s48 = sshra.s32 %s47, 3
  %s49 = sand.u32 %s47, 7
  %s50 = smul.addr %s48, 4
  %s51 = scalar_lea.vmem %s1, %s50
  %v52 = vld [vmem:[%s51] sm:$0xf]
  %v53 = vld [vmem:[%s51 + $0x4] sm:$0xf]
  %v54 = vld [vmem:[%s51 + $0x8] sm:$0xf]
  %v55 = vld [vmem:[%s51 + $0xc] sm:$0xf]
  %v56 = vld [vmem:[%s51 + $0x10] sm:$0xf]
  %v57 = vld [vmem:[%s51 + $0x14] sm:$0xf]
  %v58 = vld [vmem:[%s51 + $0x18] sm:$0xf]
  %v59 = vld [vmem:[%s51 + $0x1c] sm:$0xf]
  %v60 = vld [vmem:[%s51 + $0x20] sm:$0xf]
  %v61 = vld [vmem:[%s51 + $0x24] sm:$0xf]
  %v62 = vld [vmem:[%s51 + $0x28] sm:$0xf]
  %v63 = vld [vmem:[%s51 + $0x2c] sm:$0xf]
  %v64 = vld [vmem:[%s51 + $0x30] sm:$0xf]
  %v65 = vld [vmem:[%s51 + $0x34] sm:$0xf]
  %v66 = vld [vmem:[%s51 + $0x38] sm:$0xf]
  %v67 = vld [vmem:[%s51 + $0x3c] sm:$0xf]
  %v68 = vld [vmem:[#allocation2] sm:$0xff]
  %v69 = vld [vmem:[#allocation2 + $0x8] sm:$0xff]
  %v70 = vld [vmem:[#allocation2 + $0x10] sm:$0xff]
  %v71 = vld [vmem:[#allocation2 + $0x18] sm:$0xff]
  %v72 = vld [vmem:[#allocation2 + $0x20] sm:$0xff]
  %v73 = vld [vmem:[#allocation2 + $0x28] sm:$0xff]
  %v74 = vld [vmem:[#allocation2 + $0x30] sm:$0xff]
  %v75 = vld [vmem:[#allocation2 + $0x38] sm:$0xff]
  %v76 = vld [vmem:[#allocation2 + $0x40] sm:$0xff]
  %v77 = vld [vmem:[#allocation2 + $0x48] sm:$0xff]
  %v78 = vld [vmem:[#allocation2 + $0x50] sm:$0xff]
  %v79 = vld [vmem:[#allocation2 + $0x58] sm:$0xff]
  %v80 = vld [vmem:[#allocation2 + $0x60] sm:$0xff]
  %v81 = vld [vmem:[#allocation2 + $0x68] sm:$0xff]
  %v82 = vld [vmem:[#allocation2 + $0x70] sm:$0xff]
  %v83 = vld [vmem:[#allocation2 + $0x78] sm:$0xff]
  %v84 = vld [vmem:[%s0] sm:$0xf]
  %v85 = vld [vmem:[%s0 + $0x4] sm:$0xf]
  %v86 = vld [vmem:[%s0 + $0x8] sm:$0xf]
  %v87 = vld [vmem:[%s0 + $0xc] sm:$0xf]
  %v88 = vld [vmem:[%s0 + $0x10] sm:$0xf]
  %v89 = vld [vmem:[%s0 + $0x14] sm:$0xf]
  %v90 = vld [vmem:[%s0 + $0x18] sm:$0xf]
  %v91 = vld [vmem:[%s0 + $0x1c] sm:$0xf]
  %v92 = vld [vmem:[%s0 + $0x20] sm:$0xf]
  %v93 = vld [vmem:[%s0 + $0x24] sm:$0xf]
  %v94 = vld [vmem:[%s0 + $0x28] sm:$0xf]
  %v95 = vld [vmem:[%s0 + $0x2c] sm:$0xf]
  %v96 = vld [vmem:[%s0 + $0x30] sm:$0xf]
  %v97 = vld [vmem:[%s0 + $0x34] sm:$0xf]
  %v98 = vld [vmem:[%s0 + $0x38] sm:$0xf]
  %v99 = vld [vmem:[%s0 + $0x3c] sm:$0xf]
  %v116 = vunpack.c.l.b16 %v84
  %v117 = vunpack.c.l.b16 %v85
  %v118 = vunpack.c.l.b16 %v86
  %v119 = vunpack.c.l.b16 %v87
  %v120 = vunpack.c.l.b16 %v88
  %v121 = vunpack.c.l.b16 %v89
  %v122 = vunpack.c.l.b16 %v90
  %v123 = vunpack.c.l.b16 %v91
  %v124 = vunpack.c.l.b16 %v92
  %v125 = vunpack.c.l.b16 %v93
  %v126 = vunpack.c.l.b16 %v94
  %v127 = vunpack.c.l.b16 %v95
  %v128 = vunpack.c.l.b16 %v96
  %v129 = vunpack.c.l.b16 %v97
  %v130 = vunpack.c.l.b16 %v98
  %v131 = vunpack.c.l.b16 %v99
  %v132 = vpack.c.b16 %v117, %v116
  %v133 = vpack.c.b16 %v119, %v118
  %v134 = vpack.c.b16 %v121, %v120
  %v135 = vpack.c.b16 %v123, %v122
  %v136 = vpack.c.b16 %v125, %v124
  %v137 = vpack.c.b16 %v127, %v126
  %v138 = vpack.c.b16 %v129, %v128
  %v139 = vpack.c.b16 %v131, %v130
  %v164 = vunpack.c.l.b16 %v52
  %v165 = vunpack.c.l.b16 %v53
  %v166 = vunpack.c.l.b16 %v54
  %v167 = vunpack.c.l.b16 %v55
  %v168 = vunpack.c.l.b16 %v56
  %v169 = vunpack.c.l.b16 %v57
  %v170 = vunpack.c.l.b16 %v58
  %v171 = vunpack.c.l.b16 %v59
  %v172 = vunpack.c.l.b16 %v60
  %v173 = vunpack.c.l.b16 %v61
  %v174 = vunpack.c.l.b16 %v62
  %v175 = vunpack.c.l.b16 %v63
  %v176 = vunpack.c.l.b16 %v64
  %v177 = vunpack.c.l.b16 %v65
  %v178 = vunpack.c.l.b16 %v66
  %v179 = vunpack.c.l.b16 %v67
  %v180 = vpack.c.b16 %v165, %v164
  %v181 = vpack.c.b16 %v167, %v166
  %v182 = vpack.c.b16 %v169, %v168
  %v183 = vpack.c.b16 %v171, %v170
  %v184 = vpack.c.b16 %v173, %v172
  %v185 = vpack.c.b16 %v175, %v174
  %v186 = vpack.c.b16 %v177, %v176
  %v187 = vpack.c.b16 %v179, %v178
  %196 = vmatprep.subr.bf16.mxu0 0
  %197 = vmatpush1.bf16.msra.mxu0 %v180
  %198 = vmatprep.subr.bf16.mxu0 0
  %199 = vmatpush1.bf16.msra.mxu0 %v181
  %200 = vmatprep.subr.bf16.mxu0 0
  %201 = vmatpush1.bf16.msra.mxu0 %v182
  %202 = vmatprep.subr.bf16.mxu0 0
  %203 = vmatpush1.bf16.msra.mxu0 %v183
  %204 = vmatprep.subr.bf16.mxu0 0
  %205 = vmatpush1.bf16.msra.mxu0 %v184
  %206 = vmatprep.subr.bf16.mxu0 0
  %207 = vmatpush1.bf16.msra.mxu0 %v185
  %208 = vmatprep.subr.bf16.mxu0 0
  %209 = vmatpush1.bf16.msra.mxu0 %v186
  %210 = vmatprep.subr.bf16.mxu0 0
  %211 = vmatpush1.bf16.msra.mxu0 %v187
  %212 = vmatprep.subr.bf16.mxu0 0
  %213 = vmatpush1.bf16.msra.mxu0 0
  %214 = vmatprep.subr.bf16.mxu0 0
  %215 = vmatpush1.bf16.msra.mxu0 0
  %216 = vmatprep.subr.bf16.mxu0 0
  %217 = vmatpush1.bf16.msra.mxu0 0
  %218 = vmatprep.subr.bf16.mxu0 0
  %219 = vmatpush1.bf16.msra.mxu0 0
  %220 = vmatprep.subr.bf16.mxu0 0
  %221 = vmatpush1.bf16.msra.mxu0 0
  %222 = vmatprep.subr.bf16.mxu0 0
  %223 = vmatpush1.bf16.msra.mxu0 0
  %224 = vmatprep.subr.bf16.mxu0 0
  %225 = vmatpush1.bf16.msra.mxu0 0
  %226 = vmatprep.subr.bf16.mxu0 0
  %227 = vmatpush1.bf16.msra.mxu0 0
  %228 = vmatprep.mubr.bf16.mxu0 0
  %229 = vmatmul.mubr.bf16.gmra.mrb[0].mxu0 %v132
  %v230 = vpop.f32.mrb[0].mxu0
  %v231 = vadd.f32 0.0, %v230
  %v232 = vpop.f32.mrb[0].mxu0
  %v233 = vpop.f32.mrb[0].mxu0
  %v234 = vadd.f32 0.0, %v233
  %v235 = vpop.f32.mrb[0].mxu0
  %236 = vmatprep.mubr.bf16.mxu0 0
  %237 = vmatmul.mubr.bf16.gmra.mrb[0].mxu0 %v133
  %v238 = vpop.f32.mrb[0].mxu0
  %v239 = vadd.f32 0.0, %v238
  %v240 = vpop.f32.mrb[0].mxu0
  %v241 = vpop.f32.mrb[0].mxu0
  %v242 = vadd.f32 0.0, %v241
  %v243 = vpop.f32.mrb[0].mxu0
  %244 = vmatprep.mubr.bf16.mxu0 0
  %245 = vmatmul.mubr.bf16.gmra.mrb[0].mxu0 %v134
  %v246 = vpop.f32.mrb[0].mxu0
  %v247 = vadd.f32 0.0, %v246
  %v248 = vpop.f32.mrb[0].mxu0
  %v249 = vpop.f32.mrb[0].mxu0
  %v250 = vadd.f32 0.0, %v249
  %v251 = vpop.f32.mrb[0].mxu0
  %252 = vmatprep.mubr.bf16.mxu0 0
  %253 = vmatmul.mubr.bf16.gmra.mrb[0].mxu0 %v135
  %v254 = vpop.f32.mrb[0].mxu0
  %v255 = vadd.f32 0.0, %v254
  %v256 = vpop.f32.mrb[0].mxu0
  %v257 = vpop.f32.mrb[0].mxu0
  %v258 = vadd.f32 0.0, %v257
  %v259 = vpop.f32.mrb[0].mxu0
  %260 = vmatprep.mubr.bf16.mxu0 0
  %261 = vmatmul.mubr.bf16.gmra.mrb[0].mxu0 %v136
  %v262 = vpop.f32.mrb[0].mxu0
  %v263 = vadd.f32 0.0, %v262
  %v264 = vpop.f32.mrb[0].mxu0
  %v265 = vpop.f32.mrb[0].mxu0
  %v266 = vadd.f32 0.0, %v265
  %v267 = vpop.f32.mrb[0].mxu0
  %268 = vmatprep.mubr.bf16.mxu0 0
  %269 = vmatmul.mubr.bf16.gmra.mrb[0].mxu0 %v137
  %v270 = vpop.f32.mrb[0].mxu0
  %v271 = vadd.f32 0.0, %v270
  %v272 = vpop.f32.mrb[0].mxu0
  %v273 = vpop.f32.mrb[0].mxu0
  %v274 = vadd.f32 0.0, %v273
  %v275 = vpop.f32.mrb[0].mxu0
  %276 = vmatprep.mubr.bf16.mxu0 0
  %277 = vmatmul.mubr.bf16.gmra.mrb[0].mxu0 %v138
  %v278 = vpop.f32.mrb[0].mxu0
  %v279 = vadd.f32 0.0, %v278
  %v280 = vpop.f32.mrb[0].mxu0
  %v281 = vpop.f32.mrb[0].mxu0
  %v282 = vadd.f32 0.0, %v281
  %v283 = vpop.f32.mrb[0].mxu0
  %284 = vmatprep.mubr.bf16.mxu0 0
  %285 = vmatmul.mubr.bf16.gmra.mrb[0].mxu0 %v139
  %v286 = vpop.f32.mrb[0].mxu0
  %v287 = vadd.f32 0.0, %v286
  %v288 = vpop.f32.mrb[0].mxu0
  %v289 = vpop.f32.mrb[0].mxu0
  %v290 = vadd.f32 0.0, %v289
  %v291 = vpop.f32.mrb[0].mxu0
  %292 = vdwg.mxu0
  %v293 = vadd.f32 %v68, %v231
  %v294 = vadd.f32 %v69, %v234
  %v295 = vadd.f32 %v70, %v239
  %v296 = vadd.f32 %v71, %v242
  %v297 = vadd.f32 %v72, %v247
  %v298 = vadd.f32 %v73, %v250
  %v299 = vadd.f32 %v74, %v255
  %v300 = vadd.f32 %v75, %v258
  %v301 = vadd.f32 %v76, %v263
  %v302 = vadd.f32 %v77, %v266
  %v303 = vadd.f32 %v78, %v271
  %v304 = vadd.f32 %v79, %v274
  %v305 = vadd.f32 %v80, %v279
  %v306 = vadd.f32 %v81, %v282
  %v307 = vadd.f32 %v82, %v287
  %v308 = vadd.f32 %v83, %v290
  %309 = vst [vmem:[#allocation2] sm:$0xff] %v293
  %310 = vst [vmem:[#allocation2 + $0x8] sm:$0xff] %v294
  %311 = vst [vmem:[#allocation2 + $0x10] sm:$0xff] %v295
  %312 = vst [vmem:[#allocation2 + $0x18] sm:$0xff] %v296
  %313 = vst [vmem:[#allocation2 + $0x20] sm:$0xff] %v297
  %314 = vst [vmem:[#allocation2 + $0x28] sm:$0xff] %v298
  %315 = vst [vmem:[#allocation2 + $0x30] sm:$0xff] %v299
  %316 = vst [vmem:[#allocation2 + $0x38] sm:$0xff] %v300
  %317 = vst [vmem:[#allocation2 + $0x40] sm:$0xff] %v301
  %318 = vst [vmem:[#allocation2 + $0x48] sm:$0xff] %v302
  %319 = vst [vmem:[#allocation2 + $0x50] sm:$0xff] %v303
  %320 = vst [vmem:[#allocation2 + $0x58] sm:$0xff] %v304
  %321 = vst [vmem:[#allocation2 + $0x60] sm:$0xff] %v305
  %322 = vst [vmem:[#allocation2 + $0x68] sm:$0xff] %v306
  %323 = vst [vmem:[#allocation2 + $0x70] sm:$0xff] %v307
  %324 = vst [vmem:[#allocation2 + $0x78] sm:$0xff] %v308
  // Predicated region
  $region34: #{gcn_block_forward.3} parent=0 // pred_check
    %p325 = pneg %p27
  $region35: #{gcn_block_forward.3} parent=0 // pred_check_branch
    %327 = sbr.rel (%p325) target = $region37
  $region36: #{gcn_block_forward.3} parent=0 // pred_region
    %v328 = vld [vmem:[#allocation2] sm:$0xff]
    %v329 = vld [vmem:[#allocation2 + $0x8] sm:$0xff]
    %v330 = vld [vmem:[#allocation2 + $0x10] sm:$0xff]
    %v331 = vld [vmem:[#allocation2 + $0x18] sm:$0xff]
    %v332 = vld [vmem:[#allocation2 + $0x20] sm:$0xff]
    %v333 = vld [vmem:[#allocation2 + $0x28] sm:$0xff]
    %v334 = vld [vmem:[#allocation2 + $0x30] sm:$0xff]
    %v335 = vld [vmem:[#allocation2 + $0x38] sm:$0xff]
    %v336 = vld [vmem:[#allocation2 + $0x40] sm:$0xff]
    %v337 = vld [vmem:[#allocation2 + $0x48] sm:$0xff]
    %v338 = vld [vmem:[#allocation2 + $0x50] sm:$0xff]
    %v339 = vld [vmem:[#allocation2 + $0x58] sm:$0xff]
    %v340 = vld [vmem:[#allocation2 + $0x60] sm:$0xff]
    %v341 = vld [vmem:[#allocation2 + $0x68] sm:$0xff]
    %v342 = vld [vmem:[#allocation2 + $0x70] sm:$0xff]
    %v343 = vld [vmem:[#allocation2 + $0x78] sm:$0xff]
    %v344 = vld [vmem:[%s2] sm:$0x1]
    %v346 = vlaneseq
    %v347 = vshrl.u32 %v346, 7
    %v348 = vsub.s32 0, %v347
    %v349 = vrot.slane %v344, %v348
    %v351 = vadd.f32 %v328, %v349
    %v352 = vadd.f32 %v329, %v349
    %v353 = vadd.f32 %v330, %v349
    %v354 = vadd.f32 %v331, %v349
    %v355 = vadd.f32 %v332, %v349
    %v356 = vadd.f32 %v333, %v349
    %v357 = vadd.f32 %v334, %v349
    %v358 = vadd.f32 %v335, %v349
    %v359 = vadd.f32 %v336, %v349
    %v360 = vadd.f32 %v337, %v349
    %v361 = vadd.f32 %v338, %v349
    %v362 = vadd.f32 %v339, %v349
    %v363 = vadd.f32 %v340, %v349
    %v364 = vadd.f32 %v341, %v349
    %v365 = vadd.f32 %v342, %v349
    %v366 = vadd.f32 %v343, %v349
    %v367 = vmax.f32 %v351, 0.0
    %v368 = vmax.f32 %v352, 0.0
    %v369 = vmax.f32 %v353, 0.0
    %v370 = vmax.f32 %v354, 0.0
    %v371 = vmax.f32 %v355, 0.0
    %v372 = vmax.f32 %v356, 0.0
    %v373 = vmax.f32 %v357, 0.0
    %v374 = vmax.f32 %v358, 0.0
    %v375 = vmax.f32 %v359, 0.0
    %v376 = vmax.f32 %v360, 0.0
    %v377 = vmax.f32 %v361, 0.0
    %v378 = vmax.f32 %v362, 0.0
    %v379 = vmax.f32 %v363, 0.0
    %v380 = vmax.f32 %v364, 0.0
    %v381 = vmax.f32 %v365, 0.0
    %v382 = vmax.f32 %v366, 0.0
    %v383 = vlaneseq
    %v384 = vand.u32 %v383, 127
    %vm385 = vcmp.lt.s32.totalorder %v384, 32
    %v386 = vsel %vm385, 1, 0
    %v387 = vcvt.s32.f32 %v386
    %388 = vadd.xlane.f32.xlu0 %v367
    %v389 = vpop.xlane.xlu0 %388
    %390 = vadd.xlane.f32.xlu0 %v368
    %v391 = vpop.xlane.xlu0 %390
    %392 = vadd.xlane.f32.xlu0 %v369
    %v393 = vpop.xlane.xlu0 %392
    %394 = vadd.xlane.f32.xlu0 %v370
    %v395 = vpop.xlane.xlu0 %394
    %396 = vadd.xlane.f32.xlu0 %v371
    %v397 = vpop.xlane.xlu0 %396
    %398 = vadd.xlane.f32.xlu0 %v372
    %v399 = vpop.xlane.xlu0 %398
    %400 = vadd.xlane.f32.xlu0 %v373
    %v401 = vpop.xlane.xlu0 %400
    %402 = vadd.xlane.f32.xlu0 %v374
    %v403 = vpop.xlane.xlu0 %402
    %404 = vadd.xlane.f32.xlu0 %v375
    %v405 = vpop.xlane.xlu0 %404
    %406 = vadd.xlane.f32.xlu0 %v376
    %v407 = vpop.xlane.xlu0 %406
    %408 = vadd.xlane.f32.xlu0 %v377
    %v409 = vpop.xlane.xlu0 %408
    %410 = vadd.xlane.f32.xlu0 %v378
    %v411 = vpop.xlane.xlu0 %410
    %412 = vadd.xlane.f32.xlu0 %v379
    %v413 = vpop.xlane.xlu0 %412
    %414 = vadd.xlane.f32.xlu0 %v380
    %v415 = vpop.xlane.xlu0 %414
    %416 = vadd.xlane.f32.xlu0 %v381
    %v417 = vpop.xlane.xlu0 %416
    %418 = vadd.xlane.f32.xlu0 %v382
    %v419 = vpop.xlane.xlu0 %418
    %v420 = vmul.f32 %v389, 0.03125
    %v421 = vmul.f32 %v391, 0.03125
    %v422 = vmul.f32 %v393, 0.03125
    %v423 = vmul.f32 %v395, 0.03125
    %v424 = vmul.f32 %v397, 0.03125
    %v425 = vmul.f32 %v399, 0.03125
    %v426 = vmul.f32 %v401, 0.03125
    %v427 = vmul.f32 %v403, 0.03125
    %v428 = vmul.f32 %v405, 0.03125
    %v429 = vmul.f32 %v407, 0.03125
    %v430 = vmul.f32 %v409, 0.03125
    %v431 = vmul.f32 %v411, 0.03125
    %v432 = vmul.f32 %v413, 0.03125
    %v433 = vmul.f32 %v415, 0.03125
    %v434 = vmul.f32 %v417, 0.03125
    %v435 = vmul.f32 %v419, 0.03125
    %v436 = vsub.f32 %v367, %v420
    %v437 = vsub.f32 %v368, %v421
    %v438 = vsub.f32 %v369, %v422
    %v439 = vsub.f32 %v370, %v423
    %v440 = vsub.f32 %v371, %v424
    %v441 = vsub.f32 %v372, %v425
    %v442 = vsub.f32 %v373, %v426
    %v443 = vsub.f32 %v374, %v427
    %v444 = vsub.f32 %v375, %v428
    %v445 = vsub.f32 %v376, %v429
    %v446 = vsub.f32 %v377, %v430
    %v447 = vsub.f32 %v378, %v431
    %v448 = vsub.f32 %v379, %v432
    %v449 = vsub.f32 %v380, %v433
    %v450 = vsub.f32 %v381, %v434
    %v451 = vsub.f32 %v382, %v435
    %v452 = vmul.f32 %v436, %v387
    %v453 = vmul.f32 %v437, %v387
    %v454 = vmul.f32 %v438, %v387
    %v455 = vmul.f32 %v439, %v387
    %v456 = vmul.f32 %v440, %v387
    %v457 = vmul.f32 %v441, %v387
    %v458 = vmul.f32 %v442, %v387
    %v459 = vmul.f32 %v443, %v387
    %v460 = vmul.f32 %v444, %v387
    %v461 = vmul.f32 %v445, %v387
    %v462 = vmul.f32 %v446, %v387
    %v463 = vmul.f32 %v447, %v387
    %v464 = vmul.f32 %v448, %v387
    %v465 = vmul.f32 %v449, %v387
    %v466 = vmul.f32 %v450, %v387
    %v467 = vmul.f32 %v451, %v387
    %v468 = vmul.f32 %v452, %v452
    %v469 = vmul.f32 %v453, %v453
    %v470 = vmul.f32 %v454, %v454
    %v471 = vmul.f32 %v455, %v455
    %v472 = vmul.f32 %v456, %v456
    %v473 = vmul.f32 %v457, %v457
    %v474 = vmul.f32 %v458, %v458
    %v475 = vmul.f32 %v459, %v459
    %v476 = vmul.f32 %v460, %v460
    %v477 = vmul.f32 %v461, %v461
    %v478 = vmul.f32 %v462, %v462
    %v479 = vmul.f32 %v463, %v463
    %v480 = vmul.f32 %v464, %v464
    %v481 = vmul.f32 %v465, %v465
    %v482 = vmul.f32 %v466, %v466
    %v483 = vmul.f32 %v467, %v467
    %484 = vadd.xlane.f32.xlu0 %v468
    %v485 = vpop.xlane.xlu0 %484
    %486 = vadd.xlane.f32.xlu0 %v469
    %v487 = vpop.xlane.xlu0 %486
    %488 = vadd.xlane.f32.xlu0 %v470
    %v489 = vpop.xlane.xlu0 %488
    %490 = vadd.xlane.f32.xlu0 %v471
    %v491 = vpop.xlane.xlu0 %490
    %492 = vadd.xlane.f32.xlu0 %v472
    %v493 = vpop.xlane.xlu0 %492
    %494 = vadd.xlane.f32.xlu0 %v473
    %v495 = vpop.xlane.xlu0 %494
    %496 = vadd.xlane.f32.xlu0 %v474
    %v497 = vpop.xlane.xlu0 %496
    %498 = vadd.xlane.f32.xlu0 %v475
    %v499 = vpop.xlane.xlu0 %498
    %500 = vadd.xlane.f32.xlu0 %v476
    %v501 = vpop.xlane.xlu0 %500
    %502 = vadd.xlane.f32.xlu0 %v477
    %v503 = vpop.xlane.xlu0 %502
    %504 = vadd.xlane.f32.xlu0 %v478
    %v505 = vpop.xlane.xlu0 %504
    %506 = vadd.xlane.f32.xlu0 %v479
    %v507 = vpop.xlane.xlu0 %506
    %508 = vadd.xlane.f32.xlu0 %v480
    %v509 = vpop.xlane.xlu0 %508
    %510 = vadd.xlane.f32.xlu0 %v481
    %v511 = vpop.xlane.xlu0 %510
    %512 = vadd.xlane.f32.xlu0 %v482
    %v513 = vpop.xlane.xlu0 %512
    %514 = vadd.xlane.f32.xlu0 %v483
    %v515 = vpop.xlane.xlu0 %514
    %v516 = vmul.f32 %v485, 0.03125
    %v517 = vmul.f32 %v487, 0.03125
    %v518 = vmul.f32 %v489, 0.03125
    %v519 = vmul.f32 %v491, 0.03125
    %v520 = vmul.f32 %v493, 0.03125
    %v521 = vmul.f32 %v495, 0.03125
    %v522 = vmul.f32 %v497, 0.03125
    %v523 = vmul.f32 %v499, 0.03125
    %v524 = vmul.f32 %v501, 0.03125
    %v525 = vmul.f32 %v503, 0.03125
    %v526 = vmul.f32 %v505, 0.03125
    %v527 = vmul.f32 %v507, 0.03125
    %v528 = vmul.f32 %v509, 0.03125
    %v529 = vmul.f32 %v511, 0.03125
    %v530 = vmul.f32 %v513, 0.03125
    %v531 = vmul.f32 %v515, 0.03125
    %v532 = vadd.f32 %v516, 1e-05
    %v533 = vadd.f32 %v517, 1e-05
    %v534 = vadd.f32 %v518, 1e-05
    %v535 = vadd.f32 %v519, 1e-05
    %v536 = vadd.f32 %v520, 1e-05
    %v537 = vadd.f32 %v521, 1e-05
    %v538 = vadd.f32 %v522, 1e-05
    %v539 = vadd.f32 %v523, 1e-05
    %v540 = vadd.f32 %v524, 1e-05
    %v541 = vadd.f32 %v525, 1e-05
    %v542 = vadd.f32 %v526, 1e-05
    %v543 = vadd.f32 %v527, 1e-05
    %v544 = vadd.f32 %v528, 1e-05
    %v545 = vadd.f32 %v529, 1e-05
    %v546 = vadd.f32 %v530, 1e-05
    %v547 = vadd.f32 %v531, 1e-05
    %v548 = vrsqrt.pop %v532
    %v549 = vrsqrt.pop %v533
    %v550 = vrsqrt.pop %v534
    %v551 = vrsqrt.pop %v535
    %v552 = vrsqrt.pop %v536
    %v553 = vrsqrt.pop %v537
    %v554 = vrsqrt.pop %v538
    %v555 = vrsqrt.pop %v539
    %v556 = vrsqrt.pop %v540
    %v557 = vrsqrt.pop %v541
    %v558 = vrsqrt.pop %v542
    %v559 = vrsqrt.pop %v543
    %v560 = vrsqrt.pop %v544
    %v561 = vrsqrt.pop %v545
    %v562 = vrsqrt.pop %v546
    %v563 = vrsqrt.pop %v547
    %v564 = vmul.f32 %v452, %v548
    %v565 = vmul.f32 %v453, %v549
    %v566 = vmul.f32 %v454, %v550
    %v567 = vmul.f32 %v455, %v551
    %v568 = vmul.f32 %v456, %v552
    %v569 = vmul.f32 %v457, %v553
    %v570 = vmul.f32 %v458, %v554
    %v571 = vmul.f32 %v459, %v555
    %v572 = vmul.f32 %v460, %v556
    %v573 = vmul.f32 %v461, %v557
    %v574 = vmul.f32 %v462, %v558
    %v575 = vmul.f32 %v463, %v559
    %v576 = vmul.f32 %v464, %v560
    %v577 = vmul.f32 %v465, %v561
    %v578 = vmul.f32 %v466, %v562
    %v579 = vmul.f32 %v467, %v563
    %v580 = vld [vmem:[%s3] sm:$0x1]
    %v582 = vlaneseq
    %v583 = vshrl.u32 %v582, 7
    %v584 = vsub.s32 0, %v583
    %v585 = vrot.slane %v580, %v584
    %v587 = vmul.f32 %v564, %v585
    %v588 = vmul.f32 %v565, %v585
    %v589 = vmul.f32 %v566, %v585
    %v590 = vmul.f32 %v567, %v585
    %v591 = vmul.f32 %v568, %v585
    %v592 = vmul.f32 %v569, %v585
    %v593 = vmul.f32 %v570, %v585
    %v594 = vmul.f32 %v571, %v585
    %v595 = vmul.f32 %v572, %v585
    %v596 = vmul.f32 %v573, %v585
    %v597 = vmul.f32 %v574, %v585
    %v598 = vmul.f32 %v575, %v585
    %v599 = vmul.f32 %v576, %v585
    %v600 = vmul.f32 %v577, %v585
    %v601 = vmul.f32 %v578, %v585
    %v602 = vmul.f32 %v579, %v585
    %v603 = vld [vmem:[%s4] sm:$0x1]
    %v605 = vlaneseq
    %v606 = vshrl.u32 %v605, 7
    %v607 = vsub.s32 0, %v606
    %v608 = vrot.slane %v603, %v607
    %v610 = vadd.f32 %v587, %v608
    %v611 = vadd.f32 %v588, %v608
    %v612 = vadd.f32 %v589, %v608
    %v613 = vadd.f32 %v590, %v608
    %v614 = vadd.f32 %v591, %v608
    %v615 = vadd.f32 %v592, %v608
    %v616 = vadd.f32 %v593, %v608
    %v617 = vadd.f32 %v594, %v608
    %v618 = vadd.f32 %v595, %v608
    %v619 = vadd.f32 %v596, %v608
    %v620 = vadd.f32 %v597, %v608
    %v621 = vadd.f32 %v598, %v608
    %v622 = vadd.f32 %v599, %v608
    %v623 = vadd.f32 %v600, %v608
    %v624 = vadd.f32 %v601, %v608
    %v625 = vadd.f32 %v602, %v608
    %v626 = vpack.c.bf16 %v611, %v610
    %v627 = vpack.c.bf16 %v613, %v612
    %v628 = vpack.c.bf16 %v615, %v614
    %v629 = vpack.c.bf16 %v617, %v616
    %v630 = vpack.c.bf16 %v619, %v618
    %v631 = vpack.c.bf16 %v621, %v620
    %v632 = vpack.c.bf16 %v623, %v622
    %v633 = vpack.c.bf16 %v625, %v624
    %v634 = vld [vmem:[%s5] sm:$0xf]
    %v635 = vld [vmem:[%s5 + $0x4] sm:$0xf]
    %v636 = vld [vmem:[%s5 + $0x8] sm:$0xf]
    %v637 = vld [vmem:[%s5 + $0xc] sm:$0xf]
    %v638 = vld [vmem:[%s5 + $0x10] sm:$0xf]
    %v639 = vld [vmem:[%s5 + $0x14] sm:$0xf]
    %v640 = vld [vmem:[%s5 + $0x18] sm:$0xf]
    %v641 = vld [vmem:[%s5 + $0x1c] sm:$0xf]
    %v642 = vld [vmem:[%s5 + $0x20] sm:$0xf]
    %v643 = vld [vmem:[%s5 + $0x24] sm:$0xf]
    %v644 = vld [vmem:[%s5 + $0x28] sm:$0xf]
    %v645 = vld [vmem:[%s5 + $0x2c] sm:$0xf]
    %v646 = vld [vmem:[%s5 + $0x30] sm:$0xf]
    %v647 = vld [vmem:[%s5 + $0x34] sm:$0xf]
    %v648 = vld [vmem:[%s5 + $0x38] sm:$0xf]
    %v649 = vld [vmem:[%s5 + $0x3c] sm:$0xf]
    %v650 = vld [vmem:[%s6] sm:$0x1]
    %v652 = vlaneseq
    %v653 = vshrl.u32 %v652, 7
    %v654 = vsub.s32 0, %v653
    %v655 = vrot.slane %v650, %v654
    %v673 = vunpack.c.l.b16 %v634
    %v674 = vunpack.c.l.b16 %v635
    %v675 = vunpack.c.l.b16 %v636
    %v676 = vunpack.c.l.b16 %v637
    %v677 = vunpack.c.l.b16 %v638
    %v678 = vunpack.c.l.b16 %v639
    %v679 = vunpack.c.l.b16 %v640
    %v680 = vunpack.c.l.b16 %v641
    %v681 = vunpack.c.l.b16 %v642
    %v682 = vunpack.c.l.b16 %v643
    %v683 = vunpack.c.l.b16 %v644
    %v684 = vunpack.c.l.b16 %v645
    %v685 = vunpack.c.l.b16 %v646
    %v686 = vunpack.c.l.b16 %v647
    %v687 = vunpack.c.l.b16 %v648
    %v688 = vunpack.c.l.b16 %v649
    %v689 = vpack.c.b16 %v674, %v673
    %v690 = vpack.c.b16 %v676, %v675
    %v691 = vpack.c.b16 %v678, %v677
    %v692 = vpack.c.b16 %v680, %v679
    %v693 = vpack.c.b16 %v682, %v681
    %v694 = vpack.c.b16 %v684, %v683
    %v695 = vpack.c.b16 %v686, %v685
    %v696 = vpack.c.b16 %v688, %v687
    %705 = vmatprep.subr.bf16.mxu0 0
    %706 = vmatpush1.bf16.msra.mxu0 %v689
    %707 = vmatprep.subr.bf16.mxu0 0
    %708 = vmatpush1.bf16.msra.mxu0 %v690
    %709 = vmatprep.subr.bf16.mxu0 0
    %710 = vmatpush1.bf16.msra.mxu0 %v691
    %711 = vmatprep.subr.bf16.mxu0 0
    %712 = vmatpush1.bf16.msra.mxu0 %v692
    %713 = vmatprep.subr.bf16.mxu0 0
    %714 = vmatpush1.bf16.msra.mxu0 %v693
    %715 = vmatprep.subr.bf16.mxu0 0
    %716 = vmatpush1.bf16.msra.mxu0 %v694
    %717 = vmatprep.subr.bf16.mxu0 0
    %718 = vmatpush1.bf16.msra.mxu0 %v695
    %719 = vmatprep.subr.bf16.mxu0 0
    %720 = vmatpush1.bf16.msra.mxu0 %v696
    %721 = vmatprep.subr.bf16.mxu0 0
    %722 = vmatpush1.bf16.msra.mxu0 0
    %723 = vmatprep.subr.bf16.mxu0 0
    %724 = vmatpush1.bf16.msra.mxu0 0
    %725 = vmatprep.subr.bf16.mxu0 0
    %726 = vmatpush1.bf16.msra.mxu0 0
    %727 = vmatprep.subr.bf16.mxu0 0
    %728 = vmatpush1.bf16.msra.mxu0 0
    %729 = vmatprep.subr.bf16.mxu0 0
    %730 = vmatpush1.bf16.msra.mxu0 0
    %731 = vmatprep.subr.bf16.mxu0 0
    %732 = vmatpush1.bf16.msra.mxu0 0
    %733 = vmatprep.subr.bf16.mxu0 0
    %734 = vmatpush1.bf16.msra.mxu0 0
    %735 = vmatprep.subr.bf16.mxu0 0
    %736 = vmatpush1.bf16.msra.mxu0 0
    %737 = vmatprep.mubr.bf16.mxu0 0
    %738 = vmatmul.mubr.bf16.gmra.mrb[0].mxu0 %v626
    %v739 = vpop.f32.mrb[0].mxu0
    %v740 = vadd.f32 %v655, %v739
    %v741 = vpop.f32.mrb[0].mxu0
    %v742 = vpop.f32.mrb[0].mxu0
    %v743 = vadd.f32 %v655, %v742
    %v744 = vpop.f32.mrb[0].mxu0
    %745 = vmatprep.mubr.bf16.mxu0 0
    %746 = vmatmul.mubr.bf16.gmra.mrb[0].mxu0 %v627
    %v747 = vpop.f32.mrb[0].mxu0
    %v748 = vadd.f32 %v655, %v747
    %v749 = vpop.f32.mrb[0].mxu0
    %v750 = vpop.f32.mrb[0].mxu0
    %v751 = vadd.f32 %v655, %v750
    %v752 = vpop.f32.mrb[0].mxu0
    %753 = vmatprep.mubr.bf16.mxu0 0
    %754 = vmatmul.mubr.bf16.gmra.mrb[0].mxu0 %v628
    %v755 = vpop.f32.mrb[0].mxu0
    %v756 = vadd.f32 %v655, %v755
    %v757 = vpop.f32.mrb[0].mxu0
    %v758 = vpop.f32.mrb[0].mxu0
    %v759 = vadd.f32 %v655, %v758
    %v760 = vpop.f32.mrb[0].mxu0
    %761 = vmatprep.mubr.bf16.mxu0 0
    %762 = vmatmul.mubr.bf16.gmra.mrb[0].mxu0 %v629
    %v763 = vpop.f32.mrb[0].mxu0
    %v764 = vadd.f32 %v655, %v763
    %v765 = vpop.f32.mrb[0].mxu0
    %v766 = vpop.f32.mrb[0].mxu0
    %v767 = vadd.f32 %v655, %v766
    %v768 = vpop.f32.mrb[0].mxu0
    %769 = vmatprep.mubr.bf16.mxu0 0
    %770 = vmatmul.mubr.bf16.gmra.mrb[0].mxu0 %v630
    %v771 = vpop.f32.mrb[0].mxu0
    %v772 = vadd.f32 %v655, %v771
    %v773 = vpop.f32.mrb[0].mxu0
    %v774 = vpop.f32.mrb[0].mxu0
    %v775 = vadd.f32 %v655, %v774
    %v776 = vpop.f32.mrb[0].mxu0
    %777 = vmatprep.mubr.bf16.mxu0 0
    %778 = vmatmul.mubr.bf16.gmra.mrb[0].mxu0 %v631
    %v779 = vpop.f32.mrb[0].mxu0
    %v780 = vadd.f32 %v655, %v779
    %v781 = vpop.f32.mrb[0].mxu0
    %v782 = vpop.f32.mrb[0].mxu0
    %v783 = vadd.f32 %v655, %v782
    %v784 = vpop.f32.mrb[0].mxu0
    %785 = vmatprep.mubr.bf16.mxu0 0
    %786 = vmatmul.mubr.bf16.gmra.mrb[0].mxu0 %v632
    %v787 = vpop.f32.mrb[0].mxu0
    %v788 = vadd.f32 %v655, %v787
    %v789 = vpop.f32.mrb[0].mxu0
    %v790 = vpop.f32.mrb[0].mxu0
    %v791 = vadd.f32 %v655, %v790
    %v792 = vpop.f32.mrb[0].mxu0
    %793 = vmatprep.mubr.bf16.mxu0 0
    %794 = vmatmul.mubr.bf16.gmra.mrb[0].mxu0 %v633
    %v795 = vpop.f32.mrb[0].mxu0
    %v796 = vadd.f32 %v655, %v795
    %v797 = vpop.f32.mrb[0].mxu0
    %v798 = vpop.f32.mrb[0].mxu0
    %v799 = vadd.f32 %v655, %v798
    %v800 = vpop.f32.mrb[0].mxu0
    %801 = vdwg.mxu0
    %802 = vst [vmem:[%s7] sm:$0xff] %v740
    %803 = vst [vmem:[%s7 + $0x8] sm:$0xff] %v743
    %804 = vst [vmem:[%s7 + $0x10] sm:$0xff] %v748
    %805 = vst [vmem:[%s7 + $0x18] sm:$0xff] %v751
    %806 = vst [vmem:[%s7 + $0x20] sm:$0xff] %v756
    %807 = vst [vmem:[%s7 + $0x28] sm:$0xff] %v759
    %808 = vst [vmem:[%s7 + $0x30] sm:$0xff] %v764
    %809 = vst [vmem:[%s7 + $0x38] sm:$0xff] %v767
    %810 = vst [vmem:[%s7 + $0x40] sm:$0xff] %v772
    %811 = vst [vmem:[%s7 + $0x48] sm:$0xff] %v775
    %812 = vst [vmem:[%s7 + $0x50] sm:$0xff] %v780
    %813 = vst [vmem:[%s7 + $0x58] sm:$0xff] %v783
    %814 = vst [vmem:[%s7 + $0x60] sm:$0xff] %v788
    %815 = vst [vmem:[%s7 + $0x68] sm:$0xff] %v791
    %816 = vst [vmem:[%s7 + $0x70] sm:$0xff] %v796
    %817 = vst [vmem:[%s7 + $0x78] sm:$0xff] %v799
  $region37: #{gcn_block_forward.3} parent=0 // pred_fallthru
    _
  // Predicated region
  $region38: #{gcn_block_forward.3} parent=0 // pred_check
    _
  $region39: #{gcn_block_forward.3} parent=0 // pred_check_branch
    %819 = sbr.rel (0) target = $region41
  $region40: #{gcn_block_forward.3} parent=0 // pred_region
    _
  $region41: #{gcn_block_forward.3} parent=0 // pred_fallthru
    _
  // Predicated region
  $region42: #{gcn_block_forward.3} parent=0 // pred_check
    _
  $region43: #{gcn_block_forward.3} parent=0 // pred_check_branch
    %821 = sbr.rel (0) target = $region45
  $region44: #{gcn_block_forward.3} parent=0 // pred_region
    _
  $region45: #{gcn_block_forward.3} parent=0 // pred_fallthru
    _

</llo_original>
